<compile_context>
chip_gen: v5e
topology: v5e:2x2
jax: 0.10.0
libtpu: 0.0.40
codegen_flags: <defaults>
</compile_context>

<pallas_src>
import functools

import jax
import jax.numpy as jnp
from jax.experimental import pallas as pl
from jax.experimental.pallas import tpu as pltpu


def _round_up(x: int, m: int) -> int:
    return ((x + m - 1) // m) * m


# --------------------------------------------------------------------------- #
# Fused MLP kernel: all weights/biases VMEM-resident, activations in vregs.    #
# --------------------------------------------------------------------------- #
def _mlp_kernel(x_ref, *refs, num_layers: int, slope: float, lane_major_out: bool):
    """refs = (w0, b0, w1, b1, ..., w_{L-1}, b_{L-1}, out_ref).

    Weights may be bf16 (MXU fast path); bias-add / LeakyReLU / accumulation are f32.
    x_ref is a (TB, n_in) batch tile; activations stay on-chip between layers.
    """
    out_ref = refs[-1]
    h = x_ref[...]                                          # f32 (TB, n_in)
    for i in range(num_layers):
        w = refs[2 * i][...]
        b = refs[2 * i + 1][...]                            # f32 (1, dout), broadcasts
        y = jnp.dot(h.astype(w.dtype), w, preferred_element_type=jnp.float32) + b
        if i < num_layers - 1:
            # LeakyReLU(slope), 0 < slope < 1  =>  max(y, slope*y)
            y = jnp.maximum(y, slope * y)
        h = y
    if lane_major_out:
        # n_output == 1: ship only the real column, transposed (XLU, cheap) into a
        # lane-dense (1, TB) row -> unmasked store, 1/128th the HBM writeback.
        out_ref[...] = jnp.transpose(h[:, :1]).astype(out_ref.dtype)
    else:
        out_ref[...] = h.astype(out_ref.dtype)


# --------------------------------------------------------------------------- #
# Wrapper helpers                                                              #
# --------------------------------------------------------------------------- #
def _prepare_params(params, use_bf16: bool):
    """Pad (hidden/output feature dims -> multiples of 128 lanes) and cast ONCE.

    The input feature dim stays unpadded (matches the unpadded x block). Zero padding
    is self-consistent: padded weight rows/cols and biases are 0, LeakyReLU(0)=0.
    """
    wdtype = jnp.bfloat16 if use_bf16 else jnp.float32
    n_in = int(params[0][0].shape[0])
    n_out = int(params[-1][0].shape[1])
    out_dims = tuple(_round_up(int(w.shape[1]), 128) for (w, _) in params)
    in_dims = (n_in,) + out_dims[:-1]
    padded = []
    for i, (w, b) in enumerate(params):
        din, dout = int(w.shape[0]), int(w.shape[1])
        w_p = (jnp.zeros((in_dims[i], out_dims[i]), wdtype)
               .at[:din, :dout].set(w.astype(wdtype)))
        b_p = (jnp.zeros((1, out_dims[i]), jnp.float32)
               .at[0, :dout].set(b.astype(jnp.float32)))
        padded += [w_p, b_p]
    return padded, n_in, n_out, out_dims


def _const_spec(shape, single_buffer: bool):
    """Constant-index (VMEM-resident) spec; single-buffered when supported."""
    if single_buffer:
        try:
            return pl.BlockSpec(shape, lambda i: (0, 0), pipeline_mode=pl.Buffered(1))
        except Exception:
            pass
    return pl.BlockSpec(shape, lambda i: (0, 0))


def _pick_batch_tile(B: int, batch_tile: int):
    """Tile must be a multiple of 128 or equal the padded batch (keeps the lane-major
    output block legal). Minimize batch padding first, then prefer >=2 grid steps
    (v7x megacore), then bigger tiles (per-step overhead ~0.35us)."""
    B8 = _round_up(B, 8)
    candidates = [B8] if B8 <= batch_tile else []
    t = 128
    while t <= min(batch_tile, B8):
        candidates.append(t)
        t += 128

    def cost(tb):
        bp = _round_up(B8, tb)
        return (bp, 0 if bp // tb >= 2 else 1, -tb)

    TB = min(candidates, key=cost)
    return TB, _round_up(B8, TB)


def _forward_impl(x, *, padded_params, n_in, n_out, out_dims, slope, batch_tile,
                  single_buffer_weights):
    assert x.ndim == 2 and int(x.shape[1]) == n_in
    x = x.astype(jnp.float32)
    B = int(x.shape[0])
    L = len(out_dims)
    in_dims = (n_in,) + out_dims[:-1]
    lane_major_out = (n_out == 1)

    TB, B_pad = _pick_batch_tile(B, batch_tile)
    if B_pad != B:
        # Only the batch dim is padded; the feature dim is passed unpadded
        # (block last dim == full array dim is legal; Mosaic pads K inside VMEM).
        x = jnp.pad(x, ((0, B_pad - B), (0, 0)))

    in_specs = [pl.BlockSpec((TB, n_in), lambda i: (i, 0))]
    for li in range(L):
        in_specs.append(_const_spec((in_dims[li], out_dims[li]), single_buffer_weights))
        in_specs.append(_const_spec((1, out_dims[li]), single_buffer_weights))

    if lane_major_out:
        out_shape = jax.ShapeDtypeStruct((1, B_pad), jnp.float32)
        out_specs = pl.BlockSpec((1, TB), lambda i: (0, i))
        out_hbm_bytes = B_pad * 4
        out_tile_bytes = TB * 4
    else:
        out_shape = jax.ShapeDtypeStruct((B_pad, out_dims[-1]), jnp.float32)
        out_specs = pl.BlockSpec((TB, out_dims[-1]), lambda i: (i, 0))
        out_hbm_bytes = B_pad * out_dims[-1] * 4
        out_tile_bytes = TB * out_dims[-1] * 4

    # VMEM budget: resident weights (x buffer count) + double-buffered x/out tiles
    # + headroom for f32 activations at the widest layer boundary.
    w_bytes = sum(int(a.size) * a.dtype.itemsize for a in padded_params)
    wbuf = 1 if single_buffer_weights else 2
    need = (w_bytes * wbuf + 2 * TB * n_in * 4 + 2 * out_tile_bytes
            + 4 * TB * max(out_dims) * 4)
    vmem_limit = None
    if need > (30 << 20):
        # TODO(synk): if padded weights alone exceed ~70% of v7x's 64 MiB VMEM, stream
        # the largest layer over a K/N-tiled inner grid axis instead of keeping all
        # layers resident.
        vmem_limit = int(min(need * 5 // 4, 100 << 20))

    flops = 2 * B_pad * sum(in_dims[i] * out_dims[i] for i in range(L))
    bytes_accessed = B_pad * n_in * 4 + out_hbm_bytes + w_bytes

    kernel = functools.partial(_mlp_kernel, num_layers=L, slope=slope,
                               lane_major_out=lane_major_out)

    out = pl.pallas_call(
        kernel,
        out_shape=out_shape,
        grid=(B_pad // TB,),
        in_specs=in_specs,
        out_specs=out_specs,
        compiler_params=pltpu.CompilerParams(
            dimension_semantics=("parallel",),    # independent batch tiles (v7x megacore)
            vmem_limit_bytes=vmem_limit,
        ),
        cost_estimate=pl.CostEstimate(flops=flops, transcendentals=0,
                                      bytes_accessed=bytes_accessed),
    )(x, *padded_params)

    if lane_major_out:
        return out[0, :B].reshape(B, 1)
    return out[:B, :n_out]


def make_vanilla_prednet(params, *, slope: float = 0.2, use_bf16: bool = True,
                         batch_tile: int = 512):
    """Build a jitted forward for vanilla_predNet.

    params: list of (W [din, dout], b [dout]) — hidden layers (each followed by
    LeakyReLU(slope)) then the linear tail. Weights are padded/cast once here.
    Set use_bf16=False for exact f32 matmul operands.
    """
    assert len(params) >= 1
    batch_tile = max(128, (int(batch_tile) // 128) * 128)
    padded, n_in, n_out, out_dims = _prepare_params(params, use_bf16)

    def build(single_buffer: bool):
        return jax.jit(functools.partial(
            _forward_impl, padded_params=padded, n_in=n_in, n_out=n_out,
            out_dims=out_dims, slope=slope, batch_tile=batch_tile,
            single_buffer_weights=single_buffer))

    fwd_fast = build(True)    # Buffered(1) resident weights: half the VMEM on v7x
    fwd_safe = build(False)
    state = {"fast_ok": True}

    def forward(x):
        if state["fast_ok"]:
            try:
                return fwd_fast(x)
            except Exception:
                # TODO(synk): drop this fallback once pipeline_mode=pl.Buffered(1) on
                # constant-index specs is confirmed on all deployed jax versions.
                state["fast_ok"] = False
        return fwd_safe(x)

    return forward


def init_params(key, n_input, hidden_layers, n_output=1):
    """Deterministic init mimicking torch.nn.Linear default (U[-1/sqrt(fan_in), +])."""
    params = []
    dims = [n_input] + list(hidden_layers) + [n_output]
    for i in range(len(dims) - 1):
        fan_in, fan_out = dims[i], dims[i + 1]
        key, kw, kb = jax.random.split(key, 3)
        bound = 1.0 / jnp.sqrt(jnp.float32(fan_in))
        w = jax.random.uniform(kw, (fan_in, fan_out), jnp.float32, -bound, bound)
        b = jax.random.uniform(kb, (fan_out,), jnp.float32, -bound, bound)
        params.append((w, b))
    return params


def _reference(x, params, slope=0.2):
    h = x
    for i, (w, b) in enumerate(params):
        h = h @ w + b
        if i < len(params) - 1:
            h = jnp.where(h > 0, h, slope * h)
    return h


if __name__ == "__main__":
    # Small, shape-consistent example: batch=8, n_input=32, hidden=[64, 32], n_output=1
    key = jax.random.PRNGKey(0)
    k_x, k_p, k_x2 = jax.random.split(key, 3)

    B, n_input = 8, 32
    hidden_layers = [64, 32]
    n_output = 1

    x = jax.random.normal(k_x, (B, n_input), jnp.float32)
    params = init_params(k_p, n_input, hidden_layers, n_output)
    ref = _reference(x, params)

    # Exact f32 path.
    fwd_f32 = make_vanilla_prednet(params, use_bf16=False)
    out = jax.block_until_ready(fwd_f32(x))
    assert out.shape == (B, n_output)
    assert jnp.allclose(out, ref, atol=1e-5, rtol=1e-5)

    # Batch that needs padding to the 8-row tile (exercises pad + slice path).
    x2 = jax.random.normal(k_x2, (B + 4, n_input), jnp.float32)
    out2 = jax.block_until_ready(fwd_f32(x2))
    assert out2.shape == (B + 4, n_output)
    assert jnp.allclose(out2, _reference(x2, params), atol=1e-5, rtol=1e-5)

    # bf16-operand fast path (v6e/v7x MXU throughput); f32 accumulation -> loose check.
    fwd_bf16 = make_vanilla_prednet(params, use_bf16=True)
    out_bf = jax.block_until_ready(fwd_bf16(x))
    assert out_bf.shape == (B, n_output)
    assert jnp.allclose(out_bf, ref, atol=5e-2, rtol=5e-2)

    print("KERNEL_OK")
</pallas_src>

<mosaic_0001>
module attributes {stable_mosaic.version = 11 : i64} {
  func.func @_mlp_kernel(%arg0: i32, %arg1: memref<8x32xf32, #tpu.memory_space<vmem>>, %arg2: memref<32x128xf32, #tpu.memory_space<vmem>>, %arg3: memref<1x128xf32, #tpu.memory_space<vmem>>, %arg4: memref<128x128xf32, #tpu.memory_space<vmem>>, %arg5: memref<1x128xf32, #tpu.memory_space<vmem>>, %arg6: memref<128x128xf32, #tpu.memory_space<vmem>>, %arg7: memref<1x128xf32, #tpu.memory_space<vmem>>, %arg8: memref<1x8xf32, #tpu.memory_space<vmem>>) attributes {dimension_semantics = [#tpu.dimension_semantics<parallel>], iteration_bounds = array<i64: 1>, scalar_prefetch = 0 : i64, scratch_operands = 0 : i64, tpu.core_type = #tpu.core_type<tc>, window_params = [{transform_indices = @transform_0, window_bounds = array<i64: 8, 32>}, {pipeline_mode = #tpu.pipeline_mode<synchronous>, transform_indices = @transform_1, window_bounds = array<i64: 32, 128>}, {pipeline_mode = #tpu.pipeline_mode<synchronous>, transform_indices = @transform_2, window_bounds = array<i64: 1, 128>}, {pipeline_mode = #tpu.pipeline_mode<synchronous>, transform_indices = @transform_3, window_bounds = array<i64: 128, 128>}, {pipeline_mode = #tpu.pipeline_mode<synchronous>, transform_indices = @transform_4, window_bounds = array<i64: 1, 128>}, {pipeline_mode = #tpu.pipeline_mode<synchronous>, transform_indices = @transform_5, window_bounds = array<i64: 128, 128>}, {pipeline_mode = #tpu.pipeline_mode<synchronous>, transform_indices = @transform_6, window_bounds = array<i64: 1, 128>}, {transform_indices = @transform_7, window_bounds = array<i64: 1, 8>}]} {
    %c0 = arith.constant 0 : index
    %c0_0 = arith.constant 0 : index
    %0 = vector.load %arg1[%c0, %c0_0] : memref<8x32xf32, #tpu.memory_space<vmem>>, vector<8x32xf32>
    %c0_1 = arith.constant 0 : index
    %c0_2 = arith.constant 0 : index
    %1 = vector.load %arg2[%c0_1, %c0_2] : memref<32x128xf32, #tpu.memory_space<vmem>>, vector<32x128xf32>
    %c0_3 = arith.constant 0 : index
    %c0_4 = arith.constant 0 : index
    %2 = vector.load %arg3[%c0_3, %c0_4] : memref<1x128xf32, #tpu.memory_space<vmem>>, vector<1x128xf32>
    %cst = arith.constant dense<0.000000e+00> : vector<8x128xf32>
    %3 = tpu.matmul %0, %1, %cst {dimension_numbers = #tpu.dot_dimension_numbers<[1], [0], [0], [1], [0, 0, 1, 1], [], []>} : vector<8x32xf32>, vector<32x128xf32>, vector<8x128xf32> -> vector<8x128xf32>
    %4 = vector.broadcast %2 : vector<1x128xf32> to vector<8x128xf32>
    %5 = arith.addf %3, %4 : vector<8x128xf32>
    %cst_5 = arith.constant 2.000000e-01 : f32
    %6 = vector.broadcast %cst_5 : f32 to vector<8x128xf32>
    %7 = arith.mulf %6, %5 : vector<8x128xf32>
    %8 = arith.maximumf %5, %7 : vector<8x128xf32>
    %c0_6 = arith.constant 0 : index
    %c0_7 = arith.constant 0 : index
    %9 = vector.load %arg4[%c0_6, %c0_7] : memref<128x128xf32, #tpu.memory_space<vmem>>, vector<128x128xf32>
    %c0_8 = arith.constant 0 : index
    %c0_9 = arith.constant 0 : index
    %10 = vector.load %arg5[%c0_8, %c0_9] : memref<1x128xf32, #tpu.memory_space<vmem>>, vector<1x128xf32>
    %cst_10 = arith.constant dense<0.000000e+00> : vector<8x128xf32>
    %11 = tpu.matmul %8, %9, %cst_10 {dimension_numbers = #tpu.dot_dimension_numbers<[1], [0], [0], [1], [0, 0, 1, 1], [], []>} : vector<8x128xf32>, vector<128x128xf32>, vector<8x128xf32> -> vector<8x128xf32>
    %12 = vector.broadcast %10 : vector<1x128xf32> to vector<8x128xf32>
    %13 = arith.addf %11, %12 : vector<8x128xf32>
    %cst_11 = arith.constant 2.000000e-01 : f32
    %14 = vector.broadcast %cst_11 : f32 to vector<8x128xf32>
    %15 = arith.mulf %14, %13 : vector<8x128xf32>
    %16 = arith.maximumf %13, %15 : vector<8x128xf32>
    %c0_12 = arith.constant 0 : index
    %c0_13 = arith.constant 0 : index
    %17 = vector.load %arg6[%c0_12, %c0_13] : memref<128x128xf32, #tpu.memory_space<vmem>>, vector<128x128xf32>
    %c0_14 = arith.constant 0 : index
    %c0_15 = arith.constant 0 : index
    %18 = vector.load %arg7[%c0_14, %c0_15] : memref<1x128xf32, #tpu.memory_space<vmem>>, vector<1x128xf32>
    %cst_16 = arith.constant dense<0.000000e+00> : vector<8x128xf32>
    %19 = tpu.matmul %16, %17, %cst_16 {dimension_numbers = #tpu.dot_dimension_numbers<[1], [0], [0], [1], [0, 0, 1, 1], [], []>} : vector<8x128xf32>, vector<128x128xf32>, vector<8x128xf32> -> vector<8x128xf32>
    %20 = vector.broadcast %18 : vector<1x128xf32> to vector<8x128xf32>
    %21 = arith.addf %19, %20 : vector<8x128xf32>
    %22 = vector.extract_strided_slice %21 {offsets = [0, 0], sizes = [8, 1], strides = [1, 1]} : vector<8x128xf32> to vector<8x1xf32>
    %23 = tpu.transpose %22, [1, 0] : vector<8x1xf32> -> vector<1x8xf32>
    %c0_17 = arith.constant 0 : index
    %c0_18 = arith.constant 0 : index
    %24 = vector.load %arg8[%c0_17, %c0_18] : memref<1x8xf32, #tpu.memory_space<vmem>>, vector<1x8xf32>
    tpu.vector_store %arg8[%c0_17, %c0_18], %23 {strides = array<i32>} : memref<1x8xf32, #tpu.memory_space<vmem>>, vector<1x8xf32>,
    return
  }
  func.func @transform_0(%arg0: i32) -> (i32, i32) {
    %c0_i32 = arith.constant 0 : i32
    %c0_i32_0 = arith.constant 0 : i32
    return %arg0, %c0_i32 : i32, i32
  }
  func.func @transform_1(%arg0: i32) -> (i32, i32) {
    %c0_i32 = arith.constant 0 : i32
    %c0_i32_0 = arith.constant 0 : i32
    %c0_i32_1 = arith.constant 0 : i32
    return %c0_i32, %c0_i32_0 : i32, i32
  }
  func.func @transform_2(%arg0: i32) -> (i32, i32) {
    %c0_i32 = arith.constant 0 : i32
    %c0_i32_0 = arith.constant 0 : i32
    %c0_i32_1 = arith.constant 0 : i32
    return %c0_i32, %c0_i32_0 : i32, i32
  }
  func.func @transform_3(%arg0: i32) -> (i32, i32) {
    %c0_i32 = arith.constant 0 : i32
    %c0_i32_0 = arith.constant 0 : i32
    %c0_i32_1 = arith.constant 0 : i32
    return %c0_i32, %c0_i32_0 : i32, i32
  }
  func.func @transform_4(%arg0: i32) -> (i32, i32) {
    %c0_i32 = arith.constant 0 : i32
    %c0_i32_0 = arith.constant 0 : i32
    %c0_i32_1 = arith.constant 0 : i32
    return %c0_i32, %c0_i32_0 : i32, i32
  }
  func.func @transform_5(%arg0: i32) -> (i32, i32) {
    %c0_i32 = arith.constant 0 : i32
    %c0_i32_0 = arith.constant 0 : i32
    %c0_i32_1 = arith.constant 0 : i32
    return %c0_i32, %c0_i32_0 : i32, i32
  }
  func.func @transform_6(%arg0: i32) -> (i32, i32) {
    %c0_i32 = arith.constant 0 : i32
    %c0_i32_0 = arith.constant 0 : i32
    %c0_i32_1 = arith.constant 0 : i32
    return %c0_i32, %c0_i32_0 : i32, i32
  }
  func.func @transform_7(%arg0: i32) -> (i32, i32) {
    %c0_i32 = arith.constant 0 : i32
    %c0_i32_0 = arith.constant 0 : i32
    return %c0_i32, %arg0 : i32, i32
  }
}

module attributes {stable_mosaic.version = 11 : i64} {
  func.func @_mlp_kernel(%arg0: i32, %arg1: memref<8x32xf32, #tpu.memory_space<vmem>>, %arg2: memref<32x128xf32, #tpu.memory_space<vmem>>, %arg3: memref<1x128xf32, #tpu.memory_space<vmem>>, %arg4: memref<128x128xf32, #tpu.memory_space<vmem>>, %arg5: memref<1x128xf32, #tpu.memory_space<vmem>>, %arg6: memref<128x128xf32, #tpu.memory_space<vmem>>, %arg7: memref<1x128xf32, #tpu.memory_space<vmem>>, %arg8: memref<1x8xf32, #tpu.memory_space<vmem>>) attributes {dimension_semantics = [#tpu.dimension_semantics<parallel>], iteration_bounds = array<i64: 1>, scalar_prefetch = 0 : i64, scratch_operands = 0 : i64, tpu.core_type = #tpu.core_type<tc>, window_params = [{transform_indices = @transform_0, window_bounds = array<i64: 8, 32>}, {pipeline_mode = #tpu.pipeline_mode<synchronous>, transform_indices = @transform_1, window_bounds = array<i64: 32, 128>}, {pipeline_mode = #tpu.pipeline_mode<synchronous>, transform_indices = @transform_2, window_bounds = array<i64: 1, 128>}, {pipeline_mode = #tpu.pipeline_mode<synchronous>, transform_indices = @transform_3, window_bounds = array<i64: 128, 128>}, {pipeline_mode = #tpu.pipeline_mode<synchronous>, transform_indices = @transform_4, window_bounds = array<i64: 1, 128>}, {pipeline_mode = #tpu.pipeline_mode<synchronous>, transform_indices = @transform_5, window_bounds = array<i64: 128, 128>}, {pipeline_mode = #tpu.pipeline_mode<synchronous>, transform_indices = @transform_6, window_bounds = array<i64: 1, 128>}, {transform_indices = @transform_7, window_bounds = array<i64: 1, 8>}]} {
    %c0 = arith.constant 0 : index
    %c0_0 = arith.constant 0 : index
    %0 = vector.load %arg1[%c0, %c0_0] : memref<8x32xf32, #tpu.memory_space<vmem>>, vector<8x32xf32>
    %c0_1 = arith.constant 0 : index
    %c0_2 = arith.constant 0 : index
    %1 = vector.load %arg2[%c0_1, %c0_2] : memref<32x128xf32, #tpu.memory_space<vmem>>, vector<32x128xf32>
    %c0_3 = arith.constant 0 : index
    %c0_4 = arith.constant 0 : index
    %2 = vector.load %arg3[%c0_3, %c0_4] : memref<1x128xf32, #tpu.memory_space<vmem>>, vector<1x128xf32>
    %cst = arith.constant dense<0.000000e+00> : vector<8x128xf32>
    %3 = tpu.matmul %0, %1, %cst {dimension_numbers = #tpu.dot_dimension_numbers<[1], [0], [0], [1], [0, 0, 1, 1], [], []>} : vector<8x32xf32>, vector<32x128xf32>, vector<8x128xf32> -> vector<8x128xf32>
    %4 = vector.broadcast %2 : vector<1x128xf32> to vector<8x128xf32>
    %5 = arith.addf %3, %4 : vector<8x128xf32>
    %cst_5 = arith.constant 2.000000e-01 : f32
    %6 = vector.broadcast %cst_5 : f32 to vector<8x128xf32>
    %7 = arith.mulf %6, %5 : vector<8x128xf32>
    %8 = arith.maximumf %5, %7 : vector<8x128xf32>
    %c0_6 = arith.constant 0 : index
    %c0_7 = arith.constant 0 : index
    %9 = vector.load %arg4[%c0_6, %c0_7] : memref<128x128xf32, #tpu.memory_space<vmem>>, vector<128x128xf32>
    %c0_8 = arith.constant 0 : index
    %c0_9 = arith.constant 0 : index
    %10 = vector.load %arg5[%c0_8, %c0_9] : memref<1x128xf32, #tpu.memory_space<vmem>>, vector<1x128xf32>
    %cst_10 = arith.constant dense<0.000000e+00> : vector<8x128xf32>
    %11 = tpu.matmul %8, %9, %cst_10 {dimension_numbers = #tpu.dot_dimension_numbers<[1], [0], [0], [1], [0, 0, 1, 1], [], []>} : vector<8x128xf32>, vector<128x128xf32>, vector<8x128xf32> -> vector<8x128xf32>
    %12 = vector.broadcast %10 : vector<1x128xf32> to vector<8x128xf32>
    %13 = arith.addf %11, %12 : vector<8x128xf32>
    %cst_11 = arith.constant 2.000000e-01 : f32
    %14 = vector.broadcast %cst_11 : f32 to vector<8x128xf32>
    %15 = arith.mulf %14, %13 : vector<8x128xf32>
    %16 = arith.maximumf %13, %15 : vector<8x128xf32>
    %c0_12 = arith.constant 0 : index
    %c0_13 = arith.constant 0 : index
    %17 = vector.load %arg6[%c0_12, %c0_13] : memref<128x128xf32, #tpu.memory_space<vmem>>, vector<128x128xf32>
    %c0_14 = arith.constant 0 : index
    %c0_15 = arith.constant 0 : index
    %18 = vector.load %arg7[%c0_14, %c0_15] : memref<1x128xf32, #tpu.memory_space<vmem>>, vector<1x128xf32>
    %cst_16 = arith.constant dense<0.000000e+00> : vector<8x128xf32>
    %19 = tpu.matmul %16, %17, %cst_16 {dimension_numbers = #tpu.dot_dimension_numbers<[1], [0], [0], [1], [0, 0, 1, 1], [], []>} : vector<8x128xf32>, vector<128x128xf32>, vector<8x128xf32> -> vector<8x128xf32>
    %20 = vector.broadcast %18 : vector<1x128xf32> to vector<8x128xf32>
    %21 = arith.addf %19, %20 : vector<8x128xf32>
    %22 = vector.extract_strided_slice %21 {offsets = [0, 0], sizes = [8, 1], strides = [1, 1]} : vector<8x128xf32> to vector<8x1xf32>
    %23 = tpu.transpose %22, [1, 0] : vector<8x1xf32> -> vector<1x8xf32>
    %c0_17 = arith.constant 0 : index
    %c0_18 = arith.constant 0 : index
    %24 = vector.load %arg8[%c0_17, %c0_18] : memref<1x8xf32, #tpu.memory_space<vmem>>, vector<1x8xf32>
    tpu.vector_store %arg8[%c0_17, %c0_18], %23 {strides = array<i32>} : memref<1x8xf32, #tpu.memory_space<vmem>>, vector<1x8xf32>,
    return
  }
  func.func @transform_0(%arg0: i32) -> (i32, i32) {
    %c0_i32 = arith.constant 0 : i32
    %c0_i32_0 = arith.constant 0 : i32
    return %arg0, %c0_i32 : i32, i32
  }
  func.func @transform_1(%arg0: i32) -> (i32, i32) {
    %c0_i32 = arith.constant 0 : i32
    %c0_i32_0 = arith.constant 0 : i32
    %c0_i32_1 = arith.constant 0 : i32
    return %c0_i32, %c0_i32_0 : i32, i32
  }
  func.func @transform_2(%arg0: i32) -> (i32, i32) {
    %c0_i32 = arith.constant 0 : i32
    %c0_i32_0 = arith.constant 0 : i32
    %c0_i32_1 = arith.constant 0 : i32
    return %c0_i32, %c0_i32_0 : i32, i32
  }
  func.func @transform_3(%arg0: i32) -> (i32, i32) {
    %c0_i32 = arith.constant 0 : i32
    %c0_i32_0 = arith.constant 0 : i32
    %c0_i32_1 = arith.constant 0 : i32
    return %c0_i32, %c0_i32_0 : i32, i32
  }
  func.func @transform_4(%arg0: i32) -> (i32, i32) {
    %c0_i32 = arith.constant 0 : i32
    %c0_i32_0 = arith.constant 0 : i32
    %c0_i32_1 = arith.constant 0 : i32
    return %c0_i32, %c0_i32_0 : i32, i32
  }
  func.func @transform_5(%arg0: i32) -> (i32, i32) {
    %c0_i32 = arith.constant 0 : i32
    %c0_i32_0 = arith.constant 0 : i32
    %c0_i32_1 = arith.constant 0 : i32
    return %c0_i32, %c0_i32_0 : i32, i32
  }
  func.func @transform_6(%arg0: i32) -> (i32, i32) {
    %c0_i32 = arith.constant 0 : i32
    %c0_i32_0 = arith.constant 0 : i32
    %c0_i32_1 = arith.constant 0 : i32
    return %c0_i32, %c0_i32_0 : i32, i32
  }
  func.func @transform_7(%arg0: i32) -> (i32, i32) {
    %c0_i32 = arith.constant 0 : i32
    %c0_i32_0 = arith.constant 0 : i32
    return %c0_i32, %arg0 : i32, i32
  }
}

</mosaic_0001>

<llo_original>
// kernel: _forward_impl.1
$region0: #{_forward_impl.1}
  #allocation0 [shape = 'u32[]', space=smem, size = 0x4, offset = 0x4, fixed_abs, tag = 'smem constant byte address 0x4 - core index']
  #allocation1 [shape = 'u32[72,128]{1,0:T(1,128)}', space=vmem, size = 0x9000, scoped, tag = 'internal scratch']
  %s0 = inlined_call_operand.hbm [shape: f32[8,32], index: 0, kind: input, shape index: {}]
  %s1 = inlined_call_operand.hbm [shape: f32[32,128], index: 1, kind: input, shape index: {}]
  %s2 = inlined_call_operand.hbm [shape: f32[1,128], index: 2, kind: input, shape index: {}]
  %s3 = inlined_call_operand.hbm [shape: f32[128,128], index: 3, kind: input, shape index: {}]
  %s4 = inlined_call_operand.vmem [shape: f32[1,128], index: 4, kind: input, shape index: {}]
  %s5 = inlined_call_operand.hbm [shape: f32[128,128], index: 5, kind: input, shape index: {}]
  %s6 = inlined_call_operand.vmem [shape: f32[1,128], index: 6, kind: input, shape index: {}]
  %s7 = inlined_call_operand.hbm [shape: f32[1,8], index: 7, kind: output, shape index: {}]
  %s8 = sld [smem:[#allocation0]]
  $region58: #{_forward_impl.1} parent=0
    _
  %s10 = ssub.s32 1, %s8
  %s11 = scalar_select 0, %s10, %s8
  $region1: #{_forward_impl.1} parent=0
    #allocation2 [shape = 'u8[4096]{0}', space=vmem, size = 0x1000, scoped, tag = 'input window, operand 0, single buffered']
    #allocation3 [shape = 's32[1]{0}', space=sflag, size = 0x4, scoped, tag = 'scoped memory for _forward_impl.1']
    #allocation4 [shape = 's32[1]{0}', space=sflag, size = 0x4, scoped, tag = 'scoped memory for _forward_impl.1']
    #allocation5 [shape = 'u8[16384]{0}', space=vmem, size = 0x4000, scoped, tag = 'input window, operand 1, single buffered']
    #allocation6 [shape = 's32[1]{0}', space=sflag, size = 0x4, scoped, tag = 'scoped memory for _forward_impl.1']
    #allocation7 [shape = 'u8[512]{0}', space=vmem, size = 0x400, scoped, tag = 'input window, operand 2, single buffered']
    #allocation8 [shape = 'u8[65536]{0}', space=vmem, size = 0x10000, scoped, tag = 'input window, operand 3, single buffered']
    #allocation9 [shape = 's32[1]{0}', space=sflag, size = 0x4, scoped, tag = 'scoped memory for _forward_impl.1']
    #allocation10 [shape = 'u8[65536]{0}', space=vmem, size = 0x10000, scoped, tag = 'input window, operand 5, single buffered']
    #allocation11 [shape = 'u8[512]{0}', space=vmem, size = 0x400, scoped, tag = 'output window, operand 0, single buffered']
    %12 = vsyncpa [#allocation3], 0
    %13 = vsyncpa [#allocation6], 0
    %14 = vsyncpa [#allocation9], 0
    %15 = vsyncpa [#allocation4], 0
    // Predicated region
    $region2: #{_forward_impl.1} parent=1 // pred_check
      _
    $region3: #{_forward_impl.1} parent=1 // pred_check_branch
      %17 = sbr.rel (0) target = $region5
    $region4: #{_forward_impl.1} parent=1 // pred_region
      %19 = vsyncadd [#allocation3], 0
      %s21 = sshll.u32 %s0, 4
      %s22 = int_to_ptr.hbm [resolvable:$true] %s21
      %s23 = sshll.u32 [#allocation2], 4
      %s24 = int_to_ptr.vmem [resolvable:$true] %s23
      %26 = dma.hbm_to_vmem [thread:$0]  %s22, 128, %s24, [#allocation3]
    $region5: #{_forward_impl.1} parent=1 // pred_fallthru
      _
    // Predicated region
    $region6: #{_forward_impl.1} parent=1 // pred_check
      _
    $region7: #{_forward_impl.1} parent=1 // pred_check_branch
      %28 = sbr.rel (0) target = $region9
    $region8: #{_forward_impl.1} parent=1 // pred_region
      %30 = vsyncadd [#allocation6], 0
      %s31 = sshll.u32 %s1, 4
      %s32 = int_to_ptr.hbm [resolvable:$true] %s31
      %s33 = sshll.u32 [#allocation5], 4
      %s34 = int_to_ptr.vmem [resolvable:$true] %s33
      %39 = dma.hbm_to_vmem [thread:$0]  %s32, 512, %s34, [#allocation6], 128, 128, 8
    $region9: #{_forward_impl.1} parent=1 // pred_fallthru
      _
    // Predicated region
    $region10: #{_forward_impl.1} parent=1 // pred_check
      _
    $region11: #{_forward_impl.1} parent=1 // pred_check_branch
      %41 = sbr.rel (0) target = $region13
    $region12: #{_forward_impl.1} parent=1 // pred_region
      %43 = vsyncadd [#allocation6], 0
      %s45 = sshll.u32 %s2, 4
      %s46 = int_to_ptr.hbm [resolvable:$true] %s45
      %s47 = sshll.u32 [#allocation7], 4
      %s48 = int_to_ptr.vmem [resolvable:$true] %s47
      %50 = dma.hbm_to_vmem [thread:$0]  %s46, 16, %s48, [#allocation6]
    $region13: #{_forward_impl.1} parent=1 // pred_fallthru
      _
    // Predicated region
    $region14: #{_forward_impl.1} parent=1 // pred_check
      _
    $region15: #{_forward_impl.1} parent=1 // pred_check_branch
      %52 = sbr.rel (0) target = $region17
    $region16: #{_forward_impl.1} parent=1 // pred_region
      %54 = vsyncadd [#allocation9], 0
      %s55 = sshll.u32 %s3, 4
      %s56 = int_to_ptr.hbm [resolvable:$true] %s55
      %s57 = sshll.u32 [#allocation8], 4
      %s58 = int_to_ptr.vmem [resolvable:$true] %s57
      %63 = dma.hbm_to_vmem [thread:$0]  %s56, 2048, %s58, [#allocation9], 128, 128, 8
    $region17: #{_forward_impl.1} parent=1 // pred_fallthru
      _
    // Predicated region
    $region18: #{_forward_impl.1} parent=1 // pred_check
      _
    $region19: #{_forward_impl.1} parent=1 // pred_check_branch
      %65 = sbr.rel (0) target = $region21
    $region20: #{_forward_impl.1} parent=1 // pred_region
      _
    $region21: #{_forward_impl.1} parent=1 // pred_fallthru
      _
    // Predicated region
    $region22: #{_forward_impl.1} parent=1 // pred_check
      _
    $region23: #{_forward_impl.1} parent=1 // pred_check_branch
      %67 = sbr.rel (0) target = $region25
    $region24: #{_forward_impl.1} parent=1 // pred_region
      %69 = vsyncadd [#allocation9], 0
      %s70 = sshll.u32 %s5, 4
      %s71 = int_to_ptr.hbm [resolvable:$true] %s70
      %s72 = sshll.u32 [#allocation10], 4
      %s73 = int_to_ptr.vmem [resolvable:$true] %s72
      %78 = dma.hbm_to_vmem [thread:$0]  %s71, 2048, %s73, [#allocation9], 128, 128, 8
    $region25: #{_forward_impl.1} parent=1 // pred_fallthru
      _
    // Predicated region
    $region26: #{_forward_impl.1} parent=1 // pred_check
      _
    $region27: #{_forward_impl.1} parent=1 // pred_check_branch
      %80 = sbr.rel (0) target = $region29
    $region28: #{_forward_impl.1} parent=1 // pred_region
      _
    $region29: #{_forward_impl.1} parent=1 // pred_fallthru
      _
    // Predicated region
    $region30: #{_forward_impl.1} parent=1 // pred_check
      _
    $region31: #{_forward_impl.1} parent=1 // pred_check_branch
      %82 = sbr.rel (0) target = $region33
    $region32: #{_forward_impl.1} parent=1 // pred_region
      %84 = dma.done [#allocation3], 128
    $region33: #{_forward_impl.1} parent=1 // pred_fallthru
      _
    // Predicated region
    $region34: #{_forward_impl.1} parent=1 // pred_check
      _
    $region35: #{_forward_impl.1} parent=1 // pred_check_branch
      %86 = sbr.rel (0) target = $region37
    $region36: #{_forward_impl.1} parent=1 // pred_region
      %88 = dma.done [#allocation6], 512
    $region37: #{_forward_impl.1} parent=1 // pred_fallthru
      _
    // Predicated region
    $region38: #{_forward_impl.1} parent=1 // pred_check
      _
    $region39: #{_forward_impl.1} parent=1 // pred_check_branch
      %90 = sbr.rel (0) target = $region41
    $region40: #{_forward_impl.1} parent=1 // pred_region
      %92 = dma.done [#allocation6], 16
    $region41: #{_forward_impl.1} parent=1 // pred_fallthru
      _
    // Predicated region
    $region42: #{_forward_impl.1} parent=1 // pred_check
      _
    $region43: #{_forward_impl.1} parent=1 // pred_check_branch
      %94 = sbr.rel (0) target = $region45
    $region44: #{_forward_impl.1} parent=1 // pred_region
      %96 = dma.done [#allocation9], 2048
    $region45: #{_forward_impl.1} parent=1 // pred_fallthru
      _
    // Predicated region
    $region46: #{_forward_impl.1} parent=1 // pred_check
      _
    $region47: #{_forward_impl.1} parent=1 // pred_check_branch
      %98 = sbr.rel (0) target = $region49
    $region48: #{_forward_impl.1} parent=1 // pred_region
      %100 = dma.done [#allocation9], 2048
    $region49: #{_forward_impl.1} parent=1 // pred_fallthru
      _
    %v101 = vld [vmem:[#allocation2] sm:$0xff]
    %v102 = vld [vmem:[#allocation5] sm:$0xff]
    %v103 = vld [vmem:[#allocation5 + $0x8] sm:$0xff]
    %v104 = vld [vmem:[#allocation5 + $0x10] sm:$0xff]
    %v105 = vld [vmem:[#allocation5 + $0x18] sm:$0xff]
    %v106 = vld [vmem:[#allocation7] sm:$0x1]
    %v108 = vperm.slane %v106, 0
    %vm110 = vcmask 261120
    %v112 = vsel %vm110, %v101, 0
    %114 = vmatpush.msra.mxu0 0.0
    %115 = vmatpush.msra.mxu0 0.0
    %116 = vmatpush.msra.mxu0 0.0
    %117 = vmatpush.msra.mxu0 0.0
    %118 = vmatpush.msra.mxu0 0.0
    %119 = vmatpush.msra.mxu0 0.0
    %120 = vmatpush.msra.mxu0 0.0
    %121 = vmatpush.msra.mxu0 0.0
    %122 = vmatpush.msra.mxu0 0.0
    %123 = vmatpush.msra.mxu0 0.0
    %124 = vmatpush.msra.mxu0 0.0
    %125 = vmatpush.msra.mxu0 0.0
    %126 = vmatpush.msra.mxu0 %v105
    %127 = vmatpush.msra.mxu0 %v104
    %128 = vmatpush.msra.mxu0 %v103
    %129 = vmatpush.msra.mxu0 %v102
    %130 = vmatmul.f32.gmra.mxu0 %v112
    %v131 = vpop.f32.mrf.mxu0
    %v132 = vadd.f32 %v108, %v131
    %133 = vdwg.mxu0
    %v134 = vmul.f32 %v132, 0.2
    %v135 = vmax.f32 %v132, %v134
    %v136 = vld [vmem:[#allocation8] sm:$0xff]
    %v137 = vld [vmem:[#allocation8 + $0x8] sm:$0xff]
    %v138 = vld [vmem:[#allocation8 + $0x10] sm:$0xff]
    %v139 = vld [vmem:[#allocation8 + $0x18] sm:$0xff]
    %v140 = vld [vmem:[#allocation8 + $0x20] sm:$0xff]
    %v141 = vld [vmem:[#allocation8 + $0x28] sm:$0xff]
    %v142 = vld [vmem:[#allocation8 + $0x30] sm:$0xff]
    %v143 = vld [vmem:[#allocation8 + $0x38] sm:$0xff]
    %v144 = vld [vmem:[#allocation8 + $0x40] sm:$0xff]
    %v145 = vld [vmem:[#allocation8 + $0x48] sm:$0xff]
    %v146 = vld [vmem:[#allocation8 + $0x50] sm:$0xff]
    %v147 = vld [vmem:[#allocation8 + $0x58] sm:$0xff]
    %v148 = vld [vmem:[#allocation8 + $0x60] sm:$0xff]
    %v149 = vld [vmem:[#allocation8 + $0x68] sm:$0xff]
    %v150 = vld [vmem:[#allocation8 + $0x70] sm:$0xff]
    %v151 = vld [vmem:[#allocation8 + $0x78] sm:$0xff]
    %v152 = vld [vmem:[%s4] sm:$0x1]
    %v154 = vperm.slane %v152, 0
    %156 = vmatpush.msra.mxu0 %v151
    %157 = vmatpush.msra.mxu0 %v150
    %158 = vmatpush.msra.mxu0 %v149
    %159 = vmatpush.msra.mxu0 %v148
    %160 = vmatpush.msra.mxu0 %v147
    %161 = vmatpush.msra.mxu0 %v146
    %162 = vmatpush.msra.mxu0 %v145
    %163 = vmatpush.msra.mxu0 %v144
    %164 = vmatpush.msra.mxu0 %v143
    %165 = vmatpush.msra.mxu0 %v142
    %166 = vmatpush.msra.mxu0 %v141
    %167 = vmatpush.msra.mxu0 %v140
    %168 = vmatpush.msra.mxu0 %v139
    %169 = vmatpush.msra.mxu0 %v138
    %170 = vmatpush.msra.mxu0 %v137
    %171 = vmatpush.msra.mxu0 %v136
    %172 = vmatmul.f32.gmra.mxu0 %v135
    %v173 = vpop.f32.mrf.mxu0
    %v174 = vadd.f32 %v154, %v173
    %175 = vdwg.mxu0
    %v176 = vmul.f32 %v174, 0.2
    %v177 = vmax.f32 %v174, %v176
    %v178 = vld [vmem:[#allocation10] sm:$0xff]
    %v179 = vld [vmem:[#allocation10 + $0x8] sm:$0xff]
    %v180 = vld [vmem:[#allocation10 + $0x10] sm:$0xff]
    %v181 = vld [vmem:[#allocation10 + $0x18] sm:$0xff]
    %v182 = vld [vmem:[#allocation10 + $0x20] sm:$0xff]
    %v183 = vld [vmem:[#allocation10 + $0x28] sm:$0xff]
    %v184 = vld [vmem:[#allocation10 + $0x30] sm:$0xff]
    %v185 = vld [vmem:[#allocation10 + $0x38] sm:$0xff]
    %v186 = vld [vmem:[#allocation10 + $0x40] sm:$0xff]
    %v187 = vld [vmem:[#allocation10 + $0x48] sm:$0xff]
    %v188 = vld [vmem:[#allocation10 + $0x50] sm:$0xff]
    %v189 = vld [vmem:[#allocation10 + $0x58] sm:$0xff]
    %v190 = vld [vmem:[#allocation10 + $0x60] sm:$0xff]
    %v191 = vld [vmem:[#allocation10 + $0x68] sm:$0xff]
    %v192 = vld [vmem:[#allocation10 + $0x70] sm:$0xff]
    %v193 = vld [vmem:[#allocation10 + $0x78] sm:$0xff]
    %v194 = vld [vmem:[%s6] sm:$0x1]
    %v196 = vperm.slane %v194, 0
    %198 = vmatpush.msra.mxu0 %v193
    %199 = vmatpush.msra.mxu0 %v192
    %200 = vmatpush.msra.mxu0 %v191
    %201 = vmatpush.msra.mxu0 %v190
    %202 = vmatpush.msra.mxu0 %v189
    %203 = vmatpush.msra.mxu0 %v188
    %204 = vmatpush.msra.mxu0 %v187
    %205 = vmatpush.msra.mxu0 %v186
    %206 = vmatpush.msra.mxu0 %v185
    %207 = vmatpush.msra.mxu0 %v184
    %208 = vmatpush.msra.mxu0 %v183
    %209 = vmatpush.msra.mxu0 %v182
    %210 = vmatpush.msra.mxu0 %v181
    %211 = vmatpush.msra.mxu0 %v180
    %212 = vmatpush.msra.mxu0 %v179
    %213 = vmatpush.msra.mxu0 %v178
    %214 = vmatmul.f32.gmra.mxu0 %v177
    %v215 = vpop.f32.mrf.mxu0
    %v216 = vadd.f32 %v196, %v215
    %217 = vdwg.mxu0
    %218 = vxpose.xlu0.b32.start [1/16] %v216, 128
    %219 = vxpose.xlu0.b32.cont [2/16] 0.0, 128
    %220 = vxpose.xlu0.b32.cont [3/16] 0.0, 128
    %221 = vxpose.xlu0.b32.cont [4/16] 0.0, 128
    %222 = vxpose.xlu0.b32.cont [5/16] 0.0, 128
    %223 = vxpose.xlu0.b32.cont [6/16] 0.0, 128
    %224 = vxpose.xlu0.b32.cont [7/16] 0.0, 128
    %225 = vxpose.xlu0.b32.cont [8/16] 0.0, 128
    %226 = vxpose.xlu0.b32.cont [9/16] 0.0, 128
    %227 = vxpose.xlu0.b32.cont [10/16] 0.0, 128
    %228 = vxpose.xlu0.b32.cont [11/16] 0.0, 128
    %229 = vxpose.xlu0.b32.cont [12/16] 0.0, 128
    %230 = vxpose.xlu0.b32.cont [13/16] 0.0, 128
    %231 = vxpose.xlu0.b32.cont [14/16] 0.0, 128
    %232 = vxpose.xlu0.b32.cont [15/16] 0.0, 128
    %233 = vxpose.xlu0.b32.end [16/16] 0.0, 128
    %v234 = vpop.trf.xlu0
    %v235 = vpop.trf.xlu0
    %v236 = vpop.trf.xlu0
    %v237 = vpop.trf.xlu0
    %v238 = vpop.trf.xlu0
    %v239 = vpop.trf.xlu0
    %v240 = vpop.trf.xlu0
    %v241 = vpop.trf.xlu0
    %v242 = vpop.trf.xlu0
    %v243 = vpop.trf.xlu0
    %v244 = vpop.trf.xlu0
    %v245 = vpop.trf.xlu0
    %v246 = vpop.trf.xlu0
    %v247 = vpop.trf.xlu0
    %v248 = vpop.trf.xlu0
    %v249 = vpop.trf.xlu0
    %vm250 = vcmask 57344
    %251 = vst.msk [vmem:[#allocation11] sm:$0x1] %vm250, %v234
    // Predicated region
    $region50: #{_forward_impl.1} parent=1 // pred_check
      _
    $region51: #{_forward_impl.1} parent=1 // pred_check_branch
      %253 = sbr.rel (0) target = $region53
    $region52: #{_forward_impl.1} parent=1 // pred_region
      %255 = vsyncadd [#allocation4], 0
      %s257 = sshll.u32 [#allocation11], 4
      %s258 = int_to_ptr.vmem [resolvable:$true] %s257
      %s259 = sshll.u32 %s7, 4
      %s260 = int_to_ptr.hbm [resolvable:$true] %s259
      %262 = dma.vmem_to_hbm [thread:$0]  %s258, 16, %s260, [#allocation4]
    $region53: #{_forward_impl.1} parent=1 // pred_fallthru
      _
    // Predicated region
    $region54: #{_forward_impl.1} parent=1 // pred_check
      _
    $region55: #{_forward_impl.1} parent=1 // pred_check_branch
      %264 = sbr.rel (0) target = $region57
    $region56: #{_forward_impl.1} parent=1 // pred_region
      %266 = dma.done [#allocation4], 16
    $region57: #{_forward_impl.1} parent=1 // pred_fallthru
      _
    %267 = vsyncpa [#allocation3], 1
    %268 = vsyncpa [#allocation6], 1
    %269 = vsyncpa [#allocation9], 1
    %270 = vsyncpa [#allocation4], 1

// kernel: _forward_impl.1
$region0: #{_forward_impl.1}
  #allocation0 [shape = 'u32[]', space=smem, size = 0x4, offset = 0x4, fixed_abs, tag = 'smem constant byte address 0x4 - core index']
  #allocation1 [shape = 'u32[72,128]{1,0:T(1,128)}', space=vmem, size = 0x9000, scoped, tag = 'internal scratch']
  %s0 = inlined_call_operand.hbm [shape: f32[8,32], index: 0, kind: input, shape index: {}]
  %s1 = inlined_call_operand.hbm [shape: f32[32,128], index: 1, kind: input, shape index: {}]
  %s2 = inlined_call_operand.hbm [shape: f32[1,128], index: 2, kind: input, shape index: {}]
  %s3 = inlined_call_operand.hbm [shape: f32[128,128], index: 3, kind: input, shape index: {}]
  %s4 = inlined_call_operand.vmem [shape: f32[1,128], index: 4, kind: input, shape index: {}]
  %s5 = inlined_call_operand.hbm [shape: f32[128,128], index: 5, kind: input, shape index: {}]
  %s6 = inlined_call_operand.vmem [shape: f32[1,128], index: 6, kind: input, shape index: {}]
  %s7 = inlined_call_operand.hbm [shape: f32[1,8], index: 7, kind: output, shape index: {}]
  %s8 = sld [smem:[#allocation0]]
  $region58: #{_forward_impl.1} parent=0
    _
  %s10 = ssub.s32 1, %s8
  %s11 = scalar_select 0, %s10, %s8
  $region1: #{_forward_impl.1} parent=0
    #allocation2 [shape = 'u8[4096]{0}', space=vmem, size = 0x1000, scoped, tag = 'input window, operand 0, single buffered']
    #allocation3 [shape = 's32[1]{0}', space=sflag, size = 0x4, scoped, tag = 'scoped memory for _forward_impl.1']
    #allocation4 [shape = 's32[1]{0}', space=sflag, size = 0x4, scoped, tag = 'scoped memory for _forward_impl.1']
    #allocation5 [shape = 'u8[16384]{0}', space=vmem, size = 0x4000, scoped, tag = 'input window, operand 1, single buffered']
    #allocation6 [shape = 's32[1]{0}', space=sflag, size = 0x4, scoped, tag = 'scoped memory for _forward_impl.1']
    #allocation7 [shape = 'u8[512]{0}', space=vmem, size = 0x400, scoped, tag = 'input window, operand 2, single buffered']
    #allocation8 [shape = 'u8[65536]{0}', space=vmem, size = 0x10000, scoped, tag = 'input window, operand 3, single buffered']
    #allocation9 [shape = 's32[1]{0}', space=sflag, size = 0x4, scoped, tag = 'scoped memory for _forward_impl.1']
    #allocation10 [shape = 'u8[65536]{0}', space=vmem, size = 0x10000, scoped, tag = 'input window, operand 5, single buffered']
    #allocation11 [shape = 'u8[512]{0}', space=vmem, size = 0x400, scoped, tag = 'output window, operand 0, single buffered']
    %12 = vsyncpa [#allocation3], 0
    %13 = vsyncpa [#allocation6], 0
    %14 = vsyncpa [#allocation9], 0
    %15 = vsyncpa [#allocation4], 0
    // Predicated region
    $region2: #{_forward_impl.1} parent=1 // pred_check
      _
    $region3: #{_forward_impl.1} parent=1 // pred_check_branch
      %17 = sbr.rel (0) target = $region5
    $region4: #{_forward_impl.1} parent=1 // pred_region
      %19 = vsyncadd [#allocation3], 0
      %s21 = sshll.u32 %s0, 4
      %s22 = int_to_ptr.hbm [resolvable:$true] %s21
      %s23 = sshll.u32 [#allocation2], 4
      %s24 = int_to_ptr.vmem [resolvable:$true] %s23
      %26 = dma.hbm_to_vmem [thread:$0]  %s22, 128, %s24, [#allocation3]
    $region5: #{_forward_impl.1} parent=1 // pred_fallthru
      _
    // Predicated region
    $region6: #{_forward_impl.1} parent=1 // pred_check
      _
    $region7: #{_forward_impl.1} parent=1 // pred_check_branch
      %28 = sbr.rel (0) target = $region9
    $region8: #{_forward_impl.1} parent=1 // pred_region
      %30 = vsyncadd [#allocation6], 0
      %s31 = sshll.u32 %s1, 4
      %s32 = int_to_ptr.hbm [resolvable:$true] %s31
      %s33 = sshll.u32 [#allocation5], 4
      %s34 = int_to_ptr.vmem [resolvable:$true] %s33
      %39 = dma.hbm_to_vmem [thread:$0]  %s32, 512, %s34, [#allocation6], 128, 128, 8
    $region9: #{_forward_impl.1} parent=1 // pred_fallthru
      _
    // Predicated region
    $region10: #{_forward_impl.1} parent=1 // pred_check
      _
    $region11: #{_forward_impl.1} parent=1 // pred_check_branch
      %41 = sbr.rel (0) target = $region13
    $region12: #{_forward_impl.1} parent=1 // pred_region
      %43 = vsyncadd [#allocation6], 0
      %s45 = sshll.u32 %s2, 4
      %s46 = int_to_ptr.hbm [resolvable:$true] %s45
      %s47 = sshll.u32 [#allocation7], 4
      %s48 = int_to_ptr.vmem [resolvable:$true] %s47
      %50 = dma.hbm_to_vmem [thread:$0]  %s46, 16, %s48, [#allocation6]
    $region13: #{_forward_impl.1} parent=1 // pred_fallthru
      _
    // Predicated region
    $region14: #{_forward_impl.1} parent=1 // pred_check
      _
    $region15: #{_forward_impl.1} parent=1 // pred_check_branch
      %52 = sbr.rel (0) target = $region17
    $region16: #{_forward_impl.1} parent=1 // pred_region
      %54 = vsyncadd [#allocation9], 0
      %s55 = sshll.u32 %s3, 4
      %s56 = int_to_ptr.hbm [resolvable:$true] %s55
      %s57 = sshll.u32 [#allocation8], 4
      %s58 = int_to_ptr.vmem [resolvable:$true] %s57
      %63 = dma.hbm_to_vmem [thread:$0]  %s56, 2048, %s58, [#allocation9], 128, 128, 8
    $region17: #{_forward_impl.1} parent=1 // pred_fallthru
      _
    // Predicated region
    $region18: #{_forward_impl.1} parent=1 // pred_check
      _
    $region19: #{_forward_impl.1} parent=1 // pred_check_branch
      %65 = sbr.rel (0) target = $region21
    $region20: #{_forward_impl.1} parent=1 // pred_region
      _
    $region21: #{_forward_impl.1} parent=1 // pred_fallthru
      _
    // Predicated region
    $region22: #{_forward_impl.1} parent=1 // pred_check
      _
    $region23: #{_forward_impl.1} parent=1 // pred_check_branch
      %67 = sbr.rel (0) target = $region25
    $region24: #{_forward_impl.1} parent=1 // pred_region
      %69 = vsyncadd [#allocation9], 0
      %s70 = sshll.u32 %s5, 4
      %s71 = int_to_ptr.hbm [resolvable:$true] %s70
      %s72 = sshll.u32 [#allocation10], 4
      %s73 = int_to_ptr.vmem [resolvable:$true] %s72
      %78 = dma.hbm_to_vmem [thread:$0]  %s71, 2048, %s73, [#allocation9], 128, 128, 8
    $region25: #{_forward_impl.1} parent=1 // pred_fallthru
      _
    // Predicated region
    $region26: #{_forward_impl.1} parent=1 // pred_check
      _
    $region27: #{_forward_impl.1} parent=1 // pred_check_branch
      %80 = sbr.rel (0) target = $region29
    $region28: #{_forward_impl.1} parent=1 // pred_region
      _
    $region29: #{_forward_impl.1} parent=1 // pred_fallthru
      _
    // Predicated region
    $region30: #{_forward_impl.1} parent=1 // pred_check
      _
    $region31: #{_forward_impl.1} parent=1 // pred_check_branch
      %82 = sbr.rel (0) target = $region33
    $region32: #{_forward_impl.1} parent=1 // pred_region
      %84 = dma.done [#allocation3], 128
    $region33: #{_forward_impl.1} parent=1 // pred_fallthru
      _
    // Predicated region
    $region34: #{_forward_impl.1} parent=1 // pred_check
      _
    $region35: #{_forward_impl.1} parent=1 // pred_check_branch
      %86 = sbr.rel (0) target = $region37
    $region36: #{_forward_impl.1} parent=1 // pred_region
      %88 = dma.done [#allocation6], 512
    $region37: #{_forward_impl.1} parent=1 // pred_fallthru
      _
    // Predicated region
    $region38: #{_forward_impl.1} parent=1 // pred_check
      _
    $region39: #{_forward_impl.1} parent=1 // pred_check_branch
      %90 = sbr.rel (0) target = $region41
    $region40: #{_forward_impl.1} parent=1 // pred_region
      %92 = dma.done [#allocation6], 16
    $region41: #{_forward_impl.1} parent=1 // pred_fallthru
      _
    // Predicated region
    $region42: #{_forward_impl.1} parent=1 // pred_check
      _
    $region43: #{_forward_impl.1} parent=1 // pred_check_branch
      %94 = sbr.rel (0) target = $region45
    $region44: #{_forward_impl.1} parent=1 // pred_region
      %96 = dma.done [#allocation9], 2048
    $region45: #{_forward_impl.1} parent=1 // pred_fallthru
      _
    // Predicated region
    $region46: #{_forward_impl.1} parent=1 // pred_check
      _
    $region47: #{_forward_impl.1} parent=1 // pred_check_branch
      %98 = sbr.rel (0) target = $region49
    $region48: #{_forward_impl.1} parent=1 // pred_region
      %100 = dma.done [#allocation9], 2048
    $region49: #{_forward_impl.1} parent=1 // pred_fallthru
      _
    %v101 = vld [vmem:[#allocation2] sm:$0xff]
    %v102 = vld [vmem:[#allocation5] sm:$0xff]
    %v103 = vld [vmem:[#allocation5 + $0x8] sm:$0xff]
    %v104 = vld [vmem:[#allocation5 + $0x10] sm:$0xff]
    %v105 = vld [vmem:[#allocation5 + $0x18] sm:$0xff]
    %v106 = vld [vmem:[#allocation7] sm:$0x1]
    %v108 = vperm.slane %v106, 0
    %vm110 = vcmask 261120
    %v112 = vsel %vm110, %v101, 0
    %114 = vmatpush.msra.mxu0 0.0
    %115 = vmatpush.msra.mxu0 0.0
    %116 = vmatpush.msra.mxu0 0.0
    %117 = vmatpush.msra.mxu0 0.0
    %118 = vmatpush.msra.mxu0 0.0
    %119 = vmatpush.msra.mxu0 0.0
    %120 = vmatpush.msra.mxu0 0.0
    %121 = vmatpush.msra.mxu0 0.0
    %122 = vmatpush.msra.mxu0 0.0
    %123 = vmatpush.msra.mxu0 0.0
    %124 = vmatpush.msra.mxu0 0.0
    %125 = vmatpush.msra.mxu0 0.0
    %126 = vmatpush.msra.mxu0 %v105
    %127 = vmatpush.msra.mxu0 %v104
    %128 = vmatpush.msra.mxu0 %v103
    %129 = vmatpush.msra.mxu0 %v102
    %130 = vmatmul.f32.gmra.mxu0 %v112
    %v131 = vpop.f32.mrf.mxu0
    %v132 = vadd.f32 %v108, %v131
    %133 = vdwg.mxu0
    %v134 = vmul.f32 %v132, 0.2
    %v135 = vmax.f32 %v132, %v134
    %v136 = vld [vmem:[#allocation8] sm:$0xff]
    %v137 = vld [vmem:[#allocation8 + $0x8] sm:$0xff]
    %v138 = vld [vmem:[#allocation8 + $0x10] sm:$0xff]
    %v139 = vld [vmem:[#allocation8 + $0x18] sm:$0xff]
    %v140 = vld [vmem:[#allocation8 + $0x20] sm:$0xff]
    %v141 = vld [vmem:[#allocation8 + $0x28] sm:$0xff]
    %v142 = vld [vmem:[#allocation8 + $0x30] sm:$0xff]
    %v143 = vld [vmem:[#allocation8 + $0x38] sm:$0xff]
    %v144 = vld [vmem:[#allocation8 + $0x40] sm:$0xff]
    %v145 = vld [vmem:[#allocation8 + $0x48] sm:$0xff]
    %v146 = vld [vmem:[#allocation8 + $0x50] sm:$0xff]
    %v147 = vld [vmem:[#allocation8 + $0x58] sm:$0xff]
    %v148 = vld [vmem:[#allocation8 + $0x60] sm:$0xff]
    %v149 = vld [vmem:[#allocation8 + $0x68] sm:$0xff]
    %v150 = vld [vmem:[#allocation8 + $0x70] sm:$0xff]
    %v151 = vld [vmem:[#allocation8 + $0x78] sm:$0xff]
    %v152 = vld [vmem:[%s4] sm:$0x1]
    %v154 = vperm.slane %v152, 0
    %156 = vmatpush.msra.mxu0 %v151
    %157 = vmatpush.msra.mxu0 %v150
    %158 = vmatpush.msra.mxu0 %v149
    %159 = vmatpush.msra.mxu0 %v148
    %160 = vmatpush.msra.mxu0 %v147
    %161 = vmatpush.msra.mxu0 %v146
    %162 = vmatpush.msra.mxu0 %v145
    %163 = vmatpush.msra.mxu0 %v144
    %164 = vmatpush.msra.mxu0 %v143
    %165 = vmatpush.msra.mxu0 %v142
    %166 = vmatpush.msra.mxu0 %v141
    %167 = vmatpush.msra.mxu0 %v140
    %168 = vmatpush.msra.mxu0 %v139
    %169 = vmatpush.msra.mxu0 %v138
    %170 = vmatpush.msra.mxu0 %v137
    %171 = vmatpush.msra.mxu0 %v136
    %172 = vmatmul.f32.gmra.mxu0 %v135
    %v173 = vpop.f32.mrf.mxu0
    %v174 = vadd.f32 %v154, %v173
    %175 = vdwg.mxu0
    %v176 = vmul.f32 %v174, 0.2
    %v177 = vmax.f32 %v174, %v176
    %v178 = vld [vmem:[#allocation10] sm:$0xff]
    %v179 = vld [vmem:[#allocation10 + $0x8] sm:$0xff]
    %v180 = vld [vmem:[#allocation10 + $0x10] sm:$0xff]
    %v181 = vld [vmem:[#allocation10 + $0x18] sm:$0xff]
    %v182 = vld [vmem:[#allocation10 + $0x20] sm:$0xff]
    %v183 = vld [vmem:[#allocation10 + $0x28] sm:$0xff]
    %v184 = vld [vmem:[#allocation10 + $0x30] sm:$0xff]
    %v185 = vld [vmem:[#allocation10 + $0x38] sm:$0xff]
    %v186 = vld [vmem:[#allocation10 + $0x40] sm:$0xff]
    %v187 = vld [vmem:[#allocation10 + $0x48] sm:$0xff]
    %v188 = vld [vmem:[#allocation10 + $0x50] sm:$0xff]
    %v189 = vld [vmem:[#allocation10 + $0x58] sm:$0xff]
    %v190 = vld [vmem:[#allocation10 + $0x60] sm:$0xff]
    %v191 = vld [vmem:[#allocation10 + $0x68] sm:$0xff]
    %v192 = vld [vmem:[#allocation10 + $0x70] sm:$0xff]
    %v193 = vld [vmem:[#allocation10 + $0x78] sm:$0xff]
    %v194 = vld [vmem:[%s6] sm:$0x1]
    %v196 = vperm.slane %v194, 0
    %198 = vmatpush.msra.mxu0 %v193
    %199 = vmatpush.msra.mxu0 %v192
    %200 = vmatpush.msra.mxu0 %v191
    %201 = vmatpush.msra.mxu0 %v190
    %202 = vmatpush.msra.mxu0 %v189
    %203 = vmatpush.msra.mxu0 %v188
    %204 = vmatpush.msra.mxu0 %v187
    %205 = vmatpush.msra.mxu0 %v186
    %206 = vmatpush.msra.mxu0 %v185
    %207 = vmatpush.msra.mxu0 %v184
    %208 = vmatpush.msra.mxu0 %v183
    %209 = vmatpush.msra.mxu0 %v182
    %210 = vmatpush.msra.mxu0 %v181
    %211 = vmatpush.msra.mxu0 %v180
    %212 = vmatpush.msra.mxu0 %v179
    %213 = vmatpush.msra.mxu0 %v178
    %214 = vmatmul.f32.gmra.mxu0 %v177
    %v215 = vpop.f32.mrf.mxu0
    %v216 = vadd.f32 %v196, %v215
    %217 = vdwg.mxu0
    %218 = vxpose.xlu0.b32.start [1/16] %v216, 128
    %219 = vxpose.xlu0.b32.cont [2/16] 0.0, 128
    %220 = vxpose.xlu0.b32.cont [3/16] 0.0, 128
    %221 = vxpose.xlu0.b32.cont [4/16] 0.0, 128
    %222 = vxpose.xlu0.b32.cont [5/16] 0.0, 128
    %223 = vxpose.xlu0.b32.cont [6/16] 0.0, 128
    %224 = vxpose.xlu0.b32.cont [7/16] 0.0, 128
    %225 = vxpose.xlu0.b32.cont [8/16] 0.0, 128
    %226 = vxpose.xlu0.b32.cont [9/16] 0.0, 128
    %227 = vxpose.xlu0.b32.cont [10/16] 0.0, 128
    %228 = vxpose.xlu0.b32.cont [11/16] 0.0, 128
    %229 = vxpose.xlu0.b32.cont [12/16] 0.0, 128
    %230 = vxpose.xlu0.b32.cont [13/16] 0.0, 128
    %231 = vxpose.xlu0.b32.cont [14/16] 0.0, 128
    %232 = vxpose.xlu0.b32.cont [15/16] 0.0, 128
    %233 = vxpose.xlu0.b32.end [16/16] 0.0, 128
    %v234 = vpop.trf.xlu0
    %v235 = vpop.trf.xlu0
    %v236 = vpop.trf.xlu0
    %v237 = vpop.trf.xlu0
    %v238 = vpop.trf.xlu0
    %v239 = vpop.trf.xlu0
    %v240 = vpop.trf.xlu0
    %v241 = vpop.trf.xlu0
    %v242 = vpop.trf.xlu0
    %v243 = vpop.trf.xlu0
    %v244 = vpop.trf.xlu0
    %v245 = vpop.trf.xlu0
    %v246 = vpop.trf.xlu0
    %v247 = vpop.trf.xlu0
    %v248 = vpop.trf.xlu0
    %v249 = vpop.trf.xlu0
    %vm250 = vcmask 57344
    %251 = vst.msk [vmem:[#allocation11] sm:$0x1] %vm250, %v234
    // Predicated region
    $region50: #{_forward_impl.1} parent=1 // pred_check
      _
    $region51: #{_forward_impl.1} parent=1 // pred_check_branch
      %253 = sbr.rel (0) target = $region53
    $region52: #{_forward_impl.1} parent=1 // pred_region
      %255 = vsyncadd [#allocation4], 0
      %s257 = sshll.u32 [#allocation11], 4
      %s258 = int_to_ptr.vmem [resolvable:$true] %s257
      %s259 = sshll.u32 %s7, 4
      %s260 = int_to_ptr.hbm [resolvable:$true] %s259
      %262 = dma.vmem_to_hbm [thread:$0]  %s258, 16, %s260, [#allocation4]
    $region53: #{_forward_impl.1} parent=1 // pred_fallthru
      _
    // Predicated region
    $region54: #{_forward_impl.1} parent=1 // pred_check
      _
    $region55: #{_forward_impl.1} parent=1 // pred_check_branch
      %264 = sbr.rel (0) target = $region57
    $region56: #{_forward_impl.1} parent=1 // pred_region
      %266 = dma.done [#allocation4], 16
    $region57: #{_forward_impl.1} parent=1 // pred_fallthru
      _
    %267 = vsyncpa [#allocation3], 1
    %268 = vsyncpa [#allocation6], 1
    %269 = vsyncpa [#allocation9], 1
    %270 = vsyncpa [#allocation4], 1

</llo_original>
